<compile_context>
chip_gen: v5e
topology: v5e:2x2
jax: 0.10.0
libtpu: 0.0.40
codegen_flags: <defaults>
</compile_context>

<pallas_src>
import functools

import numpy as np
import jax
import jax.numpy as jnp
from jax.experimental import pallas as pl
from jax.experimental.pallas import tpu as pltpu

# ----------------------- small synthetic problem sizes -----------------------
VOCAB = 20                     # len(gym_env.vocab)
E = 8                          # emb_dim
WDIM = HDIM = 8                # observation_space['name'][0:2]; maxpool kernel = HDIM
D2, D3 = 1, 2                  # observation_space['name'][2:4]
INV_LEN = 3                    # observation_space['inv'][0]
NACT = 6                       # len(gym_env.action_space)
B = 16                         # batch (small, but gives 2 parallel grid steps)

S = WDIM * HDIM                                # 64 spatial positions per batch element
CIN = (D2 * D3 + INV_LEN) * E                  # 40 real channels into conv_net
CIN_PAD = 128                                  # lane-dense padded input channels
C1, C2, C3 = 64, 128, 128                      # conv_net widths (1x1, 3x3, 3x3)
C1P = 128                                      # C1 padded to 128 (lane-aligned conv1 taps)
CH = 128                                       # MLP head hidden width
LANE = 128                                     # fused head / output / valid lane width
B_TILE = 8                                     # batch elements fused per grid step
M_TILE = B_TILE * S                            # 512 rows per step (fills MXU M dim)

TAPS = [(dy, dx) for dy in (-1, 0, 1) for dx in (-1, 0, 1)]


# ----------------------------- Pallas kernel ---------------------------------
def pvnet_kernel(z_ref, valid_ref,
                 w0_ref, wc_ref, wh1_ref, wh2_ref, bias_ref,
                 out_ref, *, roll_is_jnp):
    x = z_ref[...]                                           # (M_TILE, CIN_PAD) bf16

    # ---- hoisted per-row tap-validity masks (computed once, shared by both convs)
    gidx = jax.lax.broadcasted_iota(jnp.int32, (M_TILE, 1), 0)
    xpos = gidx % HDIM                                       # fast spatial axis
    ypos = (gidx // HDIM) % WDIM                             # slow spatial axis (per batch elem)
    ymask = {dy: jnp.logical_and(ypos + dy >= 0, ypos + dy < WDIM) for dy in (-1, 0, 1)}
    xmask = {dx: jnp.logical_and(xpos + dx >= 0, xpos + dx < HDIM) for dx in (-1, 0, 1)}
    tap_mask = [jnp.logical_and(ymask[dy], xmask[dx]) for dy, dx in TAPS]

    def shifted(a, k):
        # rows[r] <- a[(r + k) mod M_TILE]; rows that fall outside the same
        # spatial plane (incl. across fused batch elements) are zeroed by tap_mask.
        if k == 0:
            return a
        r = (-k) % M_TILE if roll_is_jnp else k % M_TILE
        return pltpu.roll(a, shift=r, axis=0)

    def conv3x3(a, w_bf16, bias):
        # a: (M_TILE, 128) f32.  Each tap shift = (+/-8-row dy roll, vreg-aligned)
        # then (+/-1 dx roll).  Rolls stay in f32 (avoids packed-sublane odd-shift
        # rolls on bf16); masking + im2col concat happen on bf16 values.
        base = {dy: (a if dy == 0 else shifted(a, dy * HDIM)) for dy in (-1, 0, 1)}
        cols = []
        for t, (dy, dx) in enumerate(TAPS):
            r = base[dy] if dx == 0 else shifted(base[dy], dx)
            cols.append(jnp.where(tap_mask[t], r.astype(jnp.bfloat16), 0.0))
        slab = jnp.concatenate(cols, axis=-1)                # (M_TILE, 9*128) bf16
        return jnp.dot(slab, w_bf16, preferred_element_type=jnp.float32) + bias

    # packed biases (f32)
    b0 = bias_ref[0:1, :C1P]
    b1 = bias_ref[1:2, :C2]
    b2 = bias_ref[2:3, :C3]
    bh1 = bias_ref[3:4, :]
    bh2 = bias_ref[4:5, :LANE]

    # conv_net: 1x1 conv -> ReLU -> 3x3 conv -> ReLU -> 3x3 conv
    h0 = jnp.maximum(jnp.dot(x, w0_ref[...], preferred_element_type=jnp.float32) + b0, 0.0)
    h1 = jnp.maximum(conv3x3(h0, wc_ref[0:9 * C1P, :], b1), 0.0)
    h2 = conv3x3(h1, wc_ref[9 * C1P:9 * (C1P + C2), :], b2)          # (M_TILE, C3)

    # MaxPool2d over the whole spatial plane, per fused batch element
    pooled = jnp.concatenate(
        [jnp.max(h2[bt * S:(bt + 1) * S, :], axis=0, keepdims=True) for bt in range(B_TILE)],
        axis=0)                                                      # (B_TILE, C3)

    # fused value/policy heads; head layout: [v | NACT logits | lane pad]
    hh = jnp.maximum(jnp.dot(pooled.astype(jnp.bfloat16), wh1_ref[...],
                             preferred_element_type=jnp.float32) + bh1, 0.0)   # (B_TILE, 2*CH)
    head = jnp.dot(hh.astype(jnp.bfloat16), wh2_ref[...],
                   preferred_element_type=jnp.float32) + bh2                   # (B_TILE, LANE)

    v = head[:, 0:1]

    # masked softmax over the lane-padded logits; valid_ref is 1.0 only on the
    # NACT logit lanes, so the value slot / padding never contribute.  Finite
    # -1e30 fill (exp underflows to exactly 0) -> no NaN for all-invalid rows.
    masked = jnp.where(valid_ref[...] > 0.5, head, -1e30)
    e = jnp.exp(masked - jnp.max(masked, axis=-1, keepdims=True))
    probs = e / jnp.sum(e, axis=-1, keepdims=True)

    # single lane-dense output store: column 0 = value, columns 1..NACT = probs
    col = jax.lax.broadcasted_iota(jnp.int32, (B_TILE, LANE), 1)
    out_ref[...] = jnp.where(col == 0, v, probs)


# -------------------- roll-semantics probe (one tiny kernel) -----------------
_ROLL_IS_JNP = None


def _roll_follows_jnp_semantics():
    """pltpu.roll is documented to behave like jnp.roll; probe the Mosaic lowering
    once so the conv-tap shift sign can never silently flip the 3x3 taps."""
    global _ROLL_IS_JNP
    if _ROLL_IS_JNP is None:
        def probe(x_ref, o_ref):
            o_ref[...] = pltpu.roll(x_ref[...], shift=1, axis=0)
        x = jnp.arange(8 * 128, dtype=jnp.float32).reshape(8, 128)
        y = pl.pallas_call(probe, out_shape=jax.ShapeDtypeStruct((8, 128), jnp.float32))(x)
        _ROLL_IS_JNP = bool(jnp.array_equal(y[1], x[0]))
    return _ROLL_IS_JNP


# ------------------------------- wrapper --------------------------------------
def pvnet_forward(z_rows, valid_padded, packed):
    """z_rows: (batch*S, CIN_PAD) bf16 (batch fused into rows, channels lane-padded);
    valid_padded: (batch, LANE) f32 with 1.0 on lanes 1..NACT for valid actions."""
    w0, wc, wh1, wh2, biases = packed
    batch = valid_padded.shape[0]
    assert z_rows.shape == (batch * S, CIN_PAD)
    assert batch % B_TILE == 0
    assert M_TILE == B_TILE * S          # roll wraparound stays inside the masked plane
    nb = batch // B_TILE

    kernel = functools.partial(pvnet_kernel, roll_is_jnp=_roll_follows_jnp_semantics())

    in_specs = [
        pl.BlockSpec((M_TILE, CIN_PAD), lambda i: (i, 0)),
        pl.BlockSpec((B_TILE, LANE), lambda i: (i, 0)),
        pl.BlockSpec(w0.shape, lambda i: (0, 0)),
        pl.BlockSpec(wc.shape, lambda i: (0, 0)),
        pl.BlockSpec(wh1.shape, lambda i: (0, 0)),
        pl.BlockSpec(wh2.shape, lambda i: (0, 0)),
        pl.BlockSpec(biases.shape, lambda i: (0, 0)),
    ]
    out_slab = pl.pallas_call(
        kernel,
        grid=(nb,),
        in_specs=in_specs,
        out_specs=pl.BlockSpec((B_TILE, LANE), lambda i: (i, 0)),
        out_shape=jax.ShapeDtypeStruct((batch, LANE), jnp.float32),
        compiler_params=pltpu.CompilerParams(
            dimension_semantics=("parallel",),
            vmem_limit_bytes=48 * 1024 * 1024),
    )(z_rows, valid_padded, w0, wc, wh1, wh2, biases)

    return out_slab[:, 0:1], out_slab[:, 1:1 + NACT]


# ----------------------------- params & packing -------------------------------
def init_params(key):
    ks = iter(jax.random.split(key, 24))
    nxt = lambda: next(ks)

    def nrm(shape, scale):
        return jax.random.normal(nxt(), shape, jnp.float32) * scale

    def bfr(x):                      # weights are consumed in bf16 by the kernel
        return x.astype(jnp.bfloat16).astype(jnp.float32)

    P = {}
    P["name_emb"] = nrm((VOCAB, E), 0.5)
    P["inv_emb"] = nrm((VOCAB, E), 0.5)
    P["w0"] = bfr(nrm((CIN, C1), CIN ** -0.5));         P["b0"] = nrm((1, C1), 0.05)
    P["w1"] = bfr(nrm((9, C1, C2), (9 * C1) ** -0.5));  P["b1"] = nrm((1, C2), 0.05)
    P["w2"] = bfr(nrm((9, C2, C3), (9 * C2) ** -0.5));  P["b2"] = nrm((1, C3), 0.05)
    P["vw1"] = bfr(nrm((C3, CH), C3 ** -0.5));  P["vb1"] = nrm((1, CH), 0.05)
    P["vw2"] = bfr(nrm((CH, 1), CH ** -0.5));   P["vb2"] = nrm((1, 1), 0.05)
    P["pw1"] = bfr(nrm((C3, CH), C3 ** -0.5));  P["pb1"] = nrm((1, CH), 0.05)
    P["pw2"] = bfr(nrm((CH, NACT), CH ** -0.5)); P["pb2"] = nrm((1, NACT), 0.05)
    return P


def pack_params(P):
    """Pack the 10 parameter tensors into 5 lane-aligned kernel buffers."""
    w0 = jnp.zeros((CIN_PAD, C1P), jnp.float32).at[:CIN, :C1].set(P["w0"])
    w1p = jnp.zeros((9, C1P, C2), jnp.float32).at[:, :C1, :].set(P["w1"])
    wc = jnp.concatenate([w1p.reshape(9 * C1P, C2),
                          P["w2"].reshape(9 * C2, C3)], axis=0)        # (2304, 128)
    wh1 = jnp.concatenate([P["vw1"], P["pw1"]], axis=1)                # (128, 256)
    wh2 = jnp.zeros((2 * CH, LANE), jnp.float32)                       # block-diag, lane-padded
    wh2 = wh2.at[:CH, 0:1].set(P["vw2"])
    wh2 = wh2.at[CH:, 1:1 + NACT].set(P["pw2"])
    biases = jnp.zeros((8, 2 * CH), jnp.float32)
    biases = biases.at[0, :C1].set(P["b0"][0])
    biases = biases.at[1, :C2].set(P["b1"][0])
    biases = biases.at[2, :C3].set(P["b2"][0])
    biases = biases.at[3, :CH].set(P["vb1"][0])
    biases = biases.at[3, CH:].set(P["pb1"][0])
    biases = biases.at[4, 0].set(P["vb2"][0, 0])
    biases = biases.at[4, 1:1 + NACT].set(P["pb2"][0])
    return (w0.astype(jnp.bfloat16), wc.astype(jnp.bfloat16),
            wh1.astype(jnp.bfloat16), wh2.astype(jnp.bfloat16), biases)


def build_inputs(P, frame_name, frame_inv):
    # TODO(synk): embedding gather + reshape/expand/channel-concat stay in XLA glue;
    # a Pallas DMA-gather is not worthwhile at these sizes.
    batch = frame_name.shape[0]
    x = P["name_emb"][frame_name]                          # (B, W, H, D2, D3, E)
    x = x.reshape(batch, WDIM, HDIM, D2 * D3 * E)
    inv = P["inv_emb"][frame_inv].reshape(batch, 1, 1, INV_LEN * E)
    inv = jnp.broadcast_to(inv, (batch, WDIM, HDIM, INV_LEN * E))
    z = jnp.concatenate([x, inv], axis=-1)                 # (B, W, H, CIN) == torch channel cat
    return z.astype(jnp.float32)


# ---------------------------- pure-JAX reference -------------------------------
def reference_forward(z, valid, P):
    with jax.default_matmul_precision("highest"):
        def conv3(a, wt):                                  # wt: (9, Cin, Cout)
            rhs = wt.reshape(3, 3, wt.shape[1], wt.shape[2])
            return jax.lax.conv_general_dilated(
                a, rhs, window_strides=(1, 1), padding="SAME",
                dimension_numbers=("NHWC", "HWIO", "NHWC"))

        h = jnp.einsum("bwhc,cd->bwhd", z, P["w0"]) + P["b0"].reshape(1, 1, 1, -1)
        h = jax.nn.relu(h)
        h = jax.nn.relu(conv3(h, P["w1"]) + P["b1"].reshape(1, 1, 1, -1))
        h = conv3(h, P["w2"]) + P["b2"].reshape(1, 1, 1, -1)
        pooled = jnp.max(h, axis=(1, 2))                   # global max-pool -> (B, 128)
        hv = jax.nn.relu(pooled @ P["vw1"] + P["vb1"])
        v = hv @ P["vw2"] + P["vb2"]
        hp = jax.nn.relu(pooled @ P["pw1"] + P["pb1"])
        logits = hp @ P["pw2"] + P["pb2"]
        masked = jnp.where(valid > 0.5, logits, -jnp.inf)
        probs = jax.nn.softmax(masked, axis=-1)
        return v, probs


# ------------------------------------ main -------------------------------------
if __name__ == "__main__":
    key = jax.random.PRNGKey(0)
    k_name, k_inv, k_params = jax.random.split(key, 3)

    frame_name = jax.random.randint(k_name, (B, WDIM, HDIM, D2, D3), 0, VOCAB)
    frame_inv = jax.random.randint(k_inv, (B, INV_LEN), 0, VOCAB)
    frame_valid = jnp.ones((B, NACT), jnp.int32).at[:, -1].set(0)   # last action invalid

    params = init_params(k_params)
    z = build_inputs(params, frame_name, frame_inv)        # (B, W, H, CIN) f32
    z_bf = z.astype(jnp.bfloat16)                          # matmul operand dtype
    packed = pack_params(params)
    valid_f = frame_valid.astype(jnp.float32)

    # lane-dense kernel inputs: pad CIN 40 -> 128, embed valid into a (B, 128) slab
    z_rows = jnp.zeros((B * S, CIN_PAD), jnp.bfloat16).at[:, :CIN].set(
        z_bf.reshape(B * S, CIN))
    valid_p = jnp.zeros((B, LANE), jnp.float32).at[:, 1:1 + NACT].set(valid_f)

    v, probs = pvnet_forward(z_rows, valid_p, packed)
    jax.block_until_ready((v, probs))

    v_ref, p_ref = reference_forward(z_bf.astype(jnp.float32), valid_f, params)
    np.testing.assert_allclose(np.asarray(v), np.asarray(v_ref), rtol=5e-2, atol=5e-2)
    np.testing.assert_allclose(np.asarray(probs), np.asarray(p_ref), rtol=5e-2, atol=5e-2)
    assert v.shape == (B, 1) and probs.shape == (B, NACT)
    assert np.allclose(np.asarray(probs).sum(-1), 1.0, atol=1e-3)

    print("KERNEL_OK")
</pallas_src>

<mosaic_0001>
module attributes {stable_mosaic.version = 11 : i64} {
  func.func @probe(%arg0: memref<8x128xf32, #tpu.memory_space<vmem>>, %arg1: memref<8x128xf32, #tpu.memory_space<vmem>>) attributes {dimension_semantics = [], scalar_prefetch = 0 : i64, scratch_operands = 0 : i64, tpu.core_type = #tpu.core_type<tc>} {
    %c0 = arith.constant 0 : index
    %c0_0 = arith.constant 0 : index
    %0 = vector.load %arg0[%c0, %c0_0] : memref<8x128xf32, #tpu.memory_space<vmem>>, vector<8x128xf32>
    %c1_i32 = arith.constant 1 : i32
    %1 = tpu.dynamic_rotate %0 by %c1_i32 dim 0 : vector<8x128xf32>, i32 -> vector<8x128xf32>
    %c0_1 = arith.constant 0 : index
    %c0_2 = arith.constant 0 : index
    %2 = vector.load %arg1[%c0_1, %c0_2] : memref<8x128xf32, #tpu.memory_space<vmem>>, vector<8x128xf32>
    tpu.vector_store %arg1[%c0_1, %c0_2], %1 {strides = array<i32>} : memref<8x128xf32, #tpu.memory_space<vmem>>, vector<8x128xf32>,
    return
  }
}

</mosaic_0001>

<llo_original>
// kernel: tpu_custom_call.1
$region0: #{tpu_custom_call.1}
  #allocation0 [shape = 'u32[]', space=smem, size = 0x4, offset = 0x4, fixed_abs, tag = 'smem constant byte address 0x4 - core index']
  #allocation1 [shape = 'u32[72,128]{1,0:T(1,128)}', space=vmem, size = 0x9000, scoped, tag = 'internal scratch']
  %s0 = inlined_call_operand.hbm [shape: f32[8,128], index: 0, kind: input, shape index: {}]
  %s1 = inlined_call_operand.hbm [shape: f32[8,128], index: 1, kind: output, shape index: {}]
  %s2 = sld [smem:[#allocation0]]
  $region18: #{tpu_custom_call.1} parent=0
    _
  %s4 = ssub.s32 1, %s2
  %s5 = scalar_select 0, %s4, %s2
  $region1: #{tpu_custom_call.1} parent=0
    #allocation2 [shape = 'u8[4096]{0}', space=vmem, size = 0x1000, scoped, tag = 'input window, operand 0, single buffered']
    #allocation3 [shape = 's32[1]{0}', space=sflag, size = 0x4, scoped, tag = 'scoped memory for tpu_custom_call.1']
    #allocation4 [shape = 's32[1]{0}', space=sflag, size = 0x4, scoped, tag = 'scoped memory for tpu_custom_call.1']
    #allocation5 [shape = 'u8[4096]{0}', space=vmem, size = 0x1000, scoped, tag = 'output window, operand 0, single buffered']
    %6 = vsyncpa [#allocation3], 0
    %7 = vsyncpa [#allocation4], 0
    // Predicated region
    $region2: #{tpu_custom_call.1} parent=1 // pred_check
      _
    $region3: #{tpu_custom_call.1} parent=1 // pred_check_branch
      %9 = sbr.rel (0) target = $region5
    $region4: #{tpu_custom_call.1} parent=1 // pred_region
      %11 = vsyncadd [#allocation3], 0
      %s13 = sshll.u32 %s0, 4
      %s14 = int_to_ptr.hbm [resolvable:$true] %s13
      %s15 = sshll.u32 [#allocation2], 4
      %s16 = int_to_ptr.vmem [resolvable:$true] %s15
      %18 = dma.hbm_to_vmem [thread:$0]  %s14, 128, %s16, [#allocation3]
    $region5: #{tpu_custom_call.1} parent=1 // pred_fallthru
      _
    // Predicated region
    $region6: #{tpu_custom_call.1} parent=1 // pred_check
      _
    $region7: #{tpu_custom_call.1} parent=1 // pred_check_branch
      %20 = sbr.rel (0) target = $region9
    $region8: #{tpu_custom_call.1} parent=1 // pred_region
      %22 = dma.done [#allocation3], 128
    $region9: #{tpu_custom_call.1} parent=1 // pred_fallthru
      _
    %v23 = vld [vmem:[#allocation2] sm:$0xff]
    %v24 = vrot.slane %v23, 7
    %25 = vst [vmem:[#allocation5] sm:$0xff] %v24
    // Predicated region
    $region10: #{tpu_custom_call.1} parent=1 // pred_check
      _
    $region11: #{tpu_custom_call.1} parent=1 // pred_check_branch
      %27 = sbr.rel (0) target = $region13
    $region12: #{tpu_custom_call.1} parent=1 // pred_region
      %29 = vsyncadd [#allocation4], 0
      %s31 = sshll.u32 [#allocation5], 4
      %s32 = int_to_ptr.vmem [resolvable:$true] %s31
      %s33 = sshll.u32 %s1, 4
      %s34 = int_to_ptr.hbm [resolvable:$true] %s33
      %36 = dma.vmem_to_hbm [thread:$0]  %s32, 128, %s34, [#allocation4]
    $region13: #{tpu_custom_call.1} parent=1 // pred_fallthru
      _
    // Predicated region
    $region14: #{tpu_custom_call.1} parent=1 // pred_check
      _
    $region15: #{tpu_custom_call.1} parent=1 // pred_check_branch
      %38 = sbr.rel (0) target = $region17
    $region16: #{tpu_custom_call.1} parent=1 // pred_region
      %40 = dma.done [#allocation4], 128
    $region17: #{tpu_custom_call.1} parent=1 // pred_fallthru
      _
    %41 = vsyncpa [#allocation3], 1
    %42 = vsyncpa [#allocation4], 1

</llo_original>
